<compile_context>
chip_gen: v7x
topology: tpu7x:2x2x1
jax: 0.10.0
libtpu: 0.0.40
codegen_flags: <defaults>
</compile_context>

<pallas_src>
import jax
import jax.numpy as jnp
from jax.experimental import pallas as pl
from jax.experimental.pallas import tpu as pltpu

LANE = 128  # TPU lane width


def label_invert_kernel(x_ref, w_ref, b_ref, o_ref):
    # Base classifier matmul: bf16 inputs, f32 MXU accumulation.
    logits = jnp.dot(x_ref[...], w_ref[...], preferred_element_type=jnp.float32)
    logits = logits + b_ref[...]
    # LabelInvert fused: 1 - sigmoid(z) == sigmoid(-z); the negation is already
    # folded into the (pre-negated) weights/bias, so only the sigmoid remains.
    o_ref[...] = jax.nn.sigmoid(logits).astype(o_ref.dtype)


def label_invert(x, w, b, *, tm=128):
    """Computes 1 - sigmoid(x @ w + b) with a batch-tiled Pallas kernel."""
    B, D = x.shape
    Dw, C = w.shape
    assert Dw == D

    # Fold the `1 - p` inversion into the parameters and pad the class/lane
    # dimension up to a multiple of 128 for unmasked lane-dense stores.
    Cp = pl.cdiv(C, LANE) * LANE
    w_neg = jnp.zeros((D, Cp), jnp.bfloat16).at[:, :C].set((-w).astype(jnp.bfloat16))
    b_neg = jnp.zeros((1, Cp), jnp.float32).at[:, :C].set((-b).astype(jnp.float32))

    # bf16 activations halve HBM traffic on this memory-bound kernel; the MXU
    # still accumulates in f32 and the sigmoid/store epilogue stays f32.
    x_bf = x.astype(jnp.bfloat16)

    # Tile the batch axis (sublane-aligned); pad B up to whole tiles.
    tm = max(8, min(tm, pl.cdiv(B, 8) * 8))
    Bp = pl.cdiv(B, tm) * tm
    if Bp != B:
        x_bf = jnp.pad(x_bf, ((0, Bp - B), (0, 0)))
    grid = (Bp // tm,)

    # Scoped-VMEM budget: double-buffered x/out tiles + resident W/b + headroom.
    vmem_bytes = 2 * (tm * D * 2 + tm * Cp * 4) + 2 * (D * Cp * 2 + Cp * 4)
    vmem_limit = int(min(max(2 * vmem_bytes, 16 * 1024 * 1024), 64 * 1024 * 1024))

    out = pl.pallas_call(
        label_invert_kernel,
        out_shape=jax.ShapeDtypeStruct((Bp, Cp), jnp.float32),
        grid=grid,
        in_specs=[
            pl.BlockSpec((tm, D), lambda i: (i, 0)),   # streamed batch tile
            pl.BlockSpec((D, Cp), lambda i: (0, 0)),   # VMEM-resident weights
            pl.BlockSpec((1, Cp), lambda i: (0, 0)),   # VMEM-resident bias
        ],
        out_specs=pl.BlockSpec((tm, Cp), lambda i: (i, 0)),
        compiler_params=pltpu.CompilerParams(
            dimension_semantics=("parallel",),
            vmem_limit_bytes=vmem_limit,
        ),
    )(x_bf, w_neg, b_neg)

    return out[:B, :C]


if __name__ == "__main__":
    key = jax.random.PRNGKey(0)
    kx, kw, kb = jax.random.split(key, 3)

    B, D, C = 256, 32, 16  # batch, flattened features, num classes (small demo)

    x = jax.random.normal(kx, (B, D), dtype=jnp.float32)
    # Deterministic base-classifier parameters (synthetic, not a checkpoint).
    w = jax.random.normal(kw, (D, C), dtype=jnp.float32) * 0.1
    b = jax.random.normal(kb, (1, C), dtype=jnp.float32) * 0.1

    out = jax.block_until_ready(label_invert(x, w, b))

    # Reference check in plain JAX (f32); kernel uses a bf16 matmul path.
    ref = 1.0 - jax.nn.sigmoid(x @ w + b)
    assert out.shape == (B, C)
    assert jnp.allclose(out, ref, atol=2e-2, rtol=2e-2), float(
        jnp.max(jnp.abs(out - ref))
    )

    print("KERNEL_OK")
</pallas_src>

<mosaic_0001>
module attributes {stable_mosaic.version = 11 : i64} {
  func.func @label_invert_kernel(%arg0: i32, %arg1: memref<128x32xbf16, #tpu.memory_space<vmem>>, %arg2: memref<32x128xbf16, #tpu.memory_space<vmem>>, %arg3: memref<1x128xf32, #tpu.memory_space<vmem>>, %arg4: memref<128x128xf32, #tpu.memory_space<vmem>>) attributes {dimension_semantics = [#tpu.dimension_semantics<parallel>], iteration_bounds = array<i64: 2>, scalar_prefetch = 0 : i64, scratch_operands = 0 : i64, tpu.core_type = #tpu.core_type<tc>, window_params = [{transform_indices = @transform_0, window_bounds = array<i64: 128, 32>}, {pipeline_mode = #tpu.pipeline_mode<synchronous>, transform_indices = @transform_1, window_bounds = array<i64: 32, 128>}, {pipeline_mode = #tpu.pipeline_mode<synchronous>, transform_indices = @transform_2, window_bounds = array<i64: 1, 128>}, {transform_indices = @transform_3, window_bounds = array<i64: 128, 128>}]} {
    %c0 = arith.constant 0 : index
    %c0_0 = arith.constant 0 : index
    %0 = vector.load %arg1[%c0, %c0_0] : memref<128x32xbf16, #tpu.memory_space<vmem>>, vector<128x32xbf16>
    %c0_1 = arith.constant 0 : index
    %c0_2 = arith.constant 0 : index
    %1 = vector.load %arg2[%c0_1, %c0_2] : memref<32x128xbf16, #tpu.memory_space<vmem>>, vector<32x128xbf16>
    %cst = arith.constant dense<0.000000e+00> : vector<128x128xf32>
    %2 = tpu.matmul %0, %1, %cst {dimension_numbers = #tpu.dot_dimension_numbers<[1], [0], [0], [1], [0, 0, 1, 1], [], []>} : vector<128x32xbf16>, vector<32x128xbf16>, vector<128x128xf32> -> vector<128x128xf32>
    %c0_3 = arith.constant 0 : index
    %c0_4 = arith.constant 0 : index
    %3 = vector.load %arg3[%c0_3, %c0_4] : memref<1x128xf32, #tpu.memory_space<vmem>>, vector<1x128xf32>
    %4 = vector.broadcast %3 : vector<1x128xf32> to vector<128x128xf32>
    %5 = arith.addf %2, %4 : vector<128x128xf32>
    %6 = arith.negf %5 : vector<128x128xf32>
    %7 = math.exp %6 : vector<128x128xf32>
    %cst_5 = arith.constant 1.000000e+00 : f32
    %8 = vector.broadcast %cst_5 : f32 to vector<128x128xf32>
    %9 = arith.addf %8, %7 : vector<128x128xf32>
    %10 = arith.divf %8, %9 : vector<128x128xf32>
    %c0_6 = arith.constant 0 : index
    %c0_7 = arith.constant 0 : index
    %11 = vector.load %arg4[%c0_6, %c0_7] : memref<128x128xf32, #tpu.memory_space<vmem>>, vector<128x128xf32>
    tpu.vector_store %arg4[%c0_6, %c0_7], %10 {strides = array<i32>} : memref<128x128xf32, #tpu.memory_space<vmem>>, vector<128x128xf32>,
    return
  }
  func.func @transform_0(%arg0: i32) -> (i32, i32) {
    %c0_i32 = arith.constant 0 : i32
    %c0_i32_0 = arith.constant 0 : i32
    return %arg0, %c0_i32 : i32, i32
  }
  func.func @transform_1(%arg0: i32) -> (i32, i32) {
    %c0_i32 = arith.constant 0 : i32
    %c0_i32_0 = arith.constant 0 : i32
    %c0_i32_1 = arith.constant 0 : i32
    return %c0_i32, %c0_i32_0 : i32, i32
  }
  func.func @transform_2(%arg0: i32) -> (i32, i32) {
    %c0_i32 = arith.constant 0 : i32
    %c0_i32_0 = arith.constant 0 : i32
    %c0_i32_1 = arith.constant 0 : i32
    return %c0_i32, %c0_i32_0 : i32, i32
  }
  func.func @transform_3(%arg0: i32) -> (i32, i32) {
    %c0_i32 = arith.constant 0 : i32
    %c0_i32_0 = arith.constant 0 : i32
    return %arg0, %c0_i32 : i32, i32
  }
}

</mosaic_0001>

<llo_original>
// kernel: tpu_custom_call.1
$region0: #{tpu_custom_call.1}
  #allocation0 [shape = 'u32[]', space=smem, size = 0x4, offset = 0x4, fixed_abs, tag = 'smem constant byte address 0x4 - core index']
  #allocation1 [shape = 'u32[144,128]{1,0:T(1,128)}', space=vmem, size = 0x12000, scoped, tag = 'internal scratch']
  %s0 = inlined_call_operand.vmem [shape: bf16[256,32], index: 0, kind: input, shape index: {}]
  %s1 = inlined_call_operand.vmem [shape: bf16[32,128], index: 1, kind: input, shape index: {}]
  %s2 = inlined_call_operand.vmem [shape: f32[1,128], index: 2, kind: input, shape index: {}]
  %s3 = inlined_call_operand.hbm [shape: f32[256,128], index: 3, kind: output, shape index: {}]
  %s4 = sld [smem:[#allocation0]]
  $region45: #{tpu_custom_call.1} parent=0
    _
  %s6 = ssub.s32 1, %s4
  %s7 = scalar_select 0, %s6, %s4
  $region1: #{tpu_custom_call.1} parent=0
    #allocation2 [shape = 'u8[131072]{0}', space=vmem, size = 0x20000, scoped, tag = 'output window, operand 0']
    #allocation3 [shape = 's32[2]{0}', space=sflag, size = 0x8, scoped, tag = 'scoped memory for tpu_custom_call.1']
    %8 = vsyncpa [#allocation3], 0
    %s9 = scalar_lea.sflag [#allocation3], 1
    %10 = vsyncpa %s9, 0
    loop: start=0, step=1, limit=4
    $region2: #{tpu_custom_call.1} parent=1 // loop_pre_header
      _
    $region3: #{tpu_custom_call.1} parent=1 // loop_header
      %s12 = sphi 0, %s16
      %p13 = scmp.ge.s32.totalorder %s12, 4
      %s22 = sphi 0, %s24
      %s25 = sphi 0, %s22
      %s26 = sphi 0, %s25
      %s42 = sphi 0, %s26
      %s46 = sphi 0, %s46
      %s48 = sphi 0, %s46
      %s49 = sphi 0, %s48
      %s63 = sphi 0, %s49
      %s67 = sphi 0, %s67
      %s69 = sphi 0, %s67
      %s70 = sphi 0, %s69
      %s84 = sphi 0, %s70
      %s90 = sphi 0, %s92
      %s93 = sphi 0, %s90
      %s94 = sphi 0, %s93
      %s110 = sphi 0, %s94
    $region4: #{tpu_custom_call.1} parent=1 // loop_header_branch
      %15 = sbr.rel (%p13) target = $region8
    $region5: #{tpu_custom_call.1} parent=1 // loop_body
      %s17 = ssub.s32 %s12, 1
      %s18 = ssub.s32 %s12, 2
      %s19 = sadd.s32 %s12, 1
      %s20 = ssub.s32 %s12, %s19
      %p21 = scmp.eq.s32.totalorder %s20, 0
      %s23 = sadd.s32 %s22, 1
      %s24 = scalar_select %p21, %s22, %s23
      %p27 = pneg %p21
      %p28 = scmp.eq.s32.totalorder %s12, 1
      %p29 = por %p27, %p28
      %p30 = scmp.ne.s32.totalorder %s22, %s25
      %p31 = scmp.eq.s32.totalorder %s12, 0
      %p32 = por %p30, %p31
      %p33 = scmp.ne.s32.totalorder %s22, %s25
      %p34 = scmp.eq.s32.totalorder %s17, 1
      %p35 = por %p33, %p34
      %p36 = scmp.ne.s32.totalorder %s25, %s26
      %p37 = scmp.eq.s32.totalorder %s17, 0
      %p38 = por %p36, %p37
      %p39 = scmp.ne.s32.totalorder %s25, %s26
      %p40 = scmp.eq.s32.totalorder %s18, 1
      %p41 = por %p39, %p40
      %p43 = scmp.ne.s32.totalorder %s26, %s42
      %p44 = scmp.eq.s32.totalorder %s18, 0
      %p45 = por %p43, %p44
      %s47 = sadd.s32 %s46, 1
      %p50 = scmp.eq.s32.totalorder %s12, 1
      %p51 = scmp.ne.s32.totalorder %s46, %s48
      %p52 = scmp.eq.s32.totalorder %s12, 0
      %p53 = por %p51, %p52
      %p54 = scmp.ne.s32.totalorder %s46, %s48
      %p55 = scmp.eq.s32.totalorder %s17, 1
      %p56 = por %p54, %p55
      %p57 = scmp.ne.s32.totalorder %s48, %s49
      %p58 = scmp.eq.s32.totalorder %s17, 0
      %p59 = por %p57, %p58
      %p60 = scmp.ne.s32.totalorder %s48, %s49
      %p61 = scmp.eq.s32.totalorder %s18, 1
      %p62 = por %p60, %p61
      %p64 = scmp.ne.s32.totalorder %s49, %s63
      %p65 = scmp.eq.s32.totalorder %s18, 0
      %p66 = por %p64, %p65
      %s68 = sadd.s32 %s67, 1
      %p71 = scmp.eq.s32.totalorder %s12, 1
      %p72 = scmp.ne.s32.totalorder %s67, %s69
      %p73 = scmp.eq.s32.totalorder %s12, 0
      %p74 = por %p72, %p73
      %p75 = scmp.ne.s32.totalorder %s67, %s69
      %p76 = scmp.eq.s32.totalorder %s17, 1
      %p77 = por %p75, %p76
      %p78 = scmp.ne.s32.totalorder %s69, %s70
      %p79 = scmp.eq.s32.totalorder %s17, 0
      %p80 = por %p78, %p79
      %p81 = scmp.ne.s32.totalorder %s69, %s70
      %p82 = scmp.eq.s32.totalorder %s18, 1
      %p83 = por %p81, %p82
      %p85 = scmp.ne.s32.totalorder %s70, %s84
      %p86 = scmp.eq.s32.totalorder %s18, 0
      %p87 = por %p85, %p86
      %s88 = ssub.s32 %s12, %s19
      %p89 = scmp.eq.s32.totalorder %s88, 0
      %s91 = sadd.s32 %s90, 1
      %s92 = scalar_select %p89, %s90, %s91
      %p95 = pneg %p89
      %p96 = scmp.eq.s32.totalorder %s12, 1
      %p97 = por %p95, %p96
      %p98 = scmp.ne.s32.totalorder %s90, %s93
      %p99 = scmp.eq.s32.totalorder %s12, 0
      %p100 = por %p98, %p99
      %p101 = scmp.ne.s32.totalorder %s90, %s93
      %p102 = scmp.eq.s32.totalorder %s17, 1
      %p103 = por %p101, %p102
      %p104 = scmp.ne.s32.totalorder %s93, %s94
      %p105 = scmp.eq.s32.totalorder %s17, 0
      %p106 = por %p104, %p105
      %p107 = scmp.ne.s32.totalorder %s93, %s94
      %p108 = scmp.eq.s32.totalorder %s18, 1
      %p109 = por %p107, %p108
      %p111 = scmp.ne.s32.totalorder %s94, %s110
      %p112 = scmp.eq.s32.totalorder %s18, 0
      %p113 = por %p111, %p112
      %p114 = scmp.le.s32.totalorder 1, %s12
      %p115 = scmp.lt.s32.totalorder %s12, 3
      %p116 = pnand %p114, %p115
      %p117 = pneg %p116
      // Predicated region
      $region9: #{tpu_custom_call.1} parent=5 // pred_check
        _
      $region10: #{tpu_custom_call.1} parent=5 // pred_check_branch
        %119 = sbr.rel (%p116) target = $region12
      $region11: #{tpu_custom_call.1} parent=5 // pred_region
        %s120 = ssub.s32 %s12, 1
        // Predicated region
        $region13: #{tpu_custom_call.1} parent=11 // pred_check
          %p121 = pneg %p59
        $region14: #{tpu_custom_call.1} parent=11 // pred_check_branch
          %123 = sbr.rel (%p121) target = $region16
        $region15: #{tpu_custom_call.1} parent=11 // pred_region
          _
        $region16: #{tpu_custom_call.1} parent=11 // pred_fallthru
          _
        // Predicated region
        $region17: #{tpu_custom_call.1} parent=11 // pred_check
          %p124 = pneg %p80
        $region18: #{tpu_custom_call.1} parent=11 // pred_check_branch
          %126 = sbr.rel (%p124) target = $region20
        $region19: #{tpu_custom_call.1} parent=11 // pred_region
          _
        $region20: #{tpu_custom_call.1} parent=11 // pred_fallthru
          _
      $region12: #{tpu_custom_call.1} parent=5 // pred_fallthru
        _
      %p127 = scmp.lt.s32.totalorder %s12, 2
      // Predicated region
      $region21: #{tpu_custom_call.1} parent=5 // pred_check
        %p128 = pneg %p127
      $region22: #{tpu_custom_call.1} parent=5 // pred_check_branch
        %130 = sbr.rel (%p128) target = $region24
      $region23: #{tpu_custom_call.1} parent=5 // pred_region
        // Predicated region
        $region25: #{tpu_custom_call.1} parent=23 // pred_check
          %p131 = pneg %p32
        $region26: #{tpu_custom_call.1} parent=23 // pred_check_branch
          %133 = sbr.rel (%p131) target = $region28
        $region27: #{tpu_custom_call.1} parent=23 // pred_region
          %s134 = smul.u32 16, %s12
          %p135 = scmp.lt.s32.totalorder %s134, 31
          %s136 = scalar_select %p135, %s134, 31
          %s137 = smul.addr %s136, 4
          %s138 = scalar_lea.vmem %s0, %s137
          %s139 = smul.u32 16, %s12
        $region28: #{tpu_custom_call.1} parent=23 // pred_fallthru
          _
      $region24: #{tpu_custom_call.1} parent=5 // pred_fallthru
        _
      %p140 = scmp.le.s32.totalorder 1, %s12
      %p141 = scmp.lt.s32.totalorder %s12, 3
      %p142 = pnand %p140, %p141
      %p143 = pneg %p142
      // Predicated region
      $region29: #{tpu_custom_call.1} parent=5 // pred_check
        _
      $region30: #{tpu_custom_call.1} parent=5 // pred_check_branch
        %145 = sbr.rel (%p142) target = $region32
      $region31: #{tpu_custom_call.1} parent=5 // pred_region
        %s146 = ssub.s32 %s12, 1
        %s147 = smul.u32 16, %s17
        %p148 = scmp.lt.s32.totalorder %s147, 31
        %s149 = scalar_select %p148, %s147, 31
        %s150 = smul.addr %s149, 4
        %s151 = scalar_lea.vmem %s0, %s150
        %p152 = pneg %p38
        %p153 = pneg %p35
        %p154 = pneg %p59
        %p155 = pneg %p56
        %p156 = pneg %p80
        %p157 = pneg %p77
        %p158 = pneg %p106
        %p159 = pneg %p103
        %s160 = sand.u32 %s93, 1
        %s161 = scalar_lea.sflag [#allocation3], %s160
        %s162 = sand.u32 %s93, 1
        %s163 = smul.addr %s162, 128
        %s164 = scalar_lea.vmem [#allocation2], %s163
        %s165 = smul.u32 16, %s17
        %p166 = scmp.lt.s32.totalorder %s165, 31
        %s167 = scalar_select %p166, %s165, 31
        %s168 = smul.addr %s167, 4
        %s169 = scalar_lea.vmem %s0, %s168
        %s170 = smul.u32 16, %s17
        %s171 = smul.u32 16, %s17
        %v173 = vld [vmem:[%s169] sm:$0xf]
        %v174 = vld [vmem:[%s169 + $0x4] sm:$0xf]
        %v175 = vld [vmem:[%s169 + $0x8] sm:$0xf]
        %v176 = vld [vmem:[%s169 + $0xc] sm:$0xf]
        %v177 = vld [vmem:[%s169 + $0x10] sm:$0xf]
        %v178 = vld [vmem:[%s169 + $0x14] sm:$0xf]
        %v179 = vld [vmem:[%s169 + $0x18] sm:$0xf]
        %v180 = vld [vmem:[%s169 + $0x1c] sm:$0xf]
        %v181 = vld [vmem:[%s169 + $0x20] sm:$0xf]
        %v182 = vld [vmem:[%s169 + $0x24] sm:$0xf]
        %v183 = vld [vmem:[%s169 + $0x28] sm:$0xf]
        %v184 = vld [vmem:[%s169 + $0x2c] sm:$0xf]
        %v185 = vld [vmem:[%s169 + $0x30] sm:$0xf]
        %v186 = vld [vmem:[%s169 + $0x34] sm:$0xf]
        %v187 = vld [vmem:[%s169 + $0x38] sm:$0xf]
        %v188 = vld [vmem:[%s169 + $0x3c] sm:$0xf]
        %v189 = vld [vmem:[%s1] sm:$0xf]
        %v190 = vld [vmem:[%s1 + $0x4] sm:$0xf]
        %v191 = vld [vmem:[%s1 + $0x8] sm:$0xf]
        %v192 = vld [vmem:[%s1 + $0xc] sm:$0xf]
        %v193 = vld [vmem:[%s2] sm:$0x1]
        %v195 = vlaneseq
        %v196 = vshrl.u32 %v195, 7
        %v197 = vsub.s32 0, %v196
        %v198 = vrot.slane %v193, %v197
        %v216 = vunpack.c.l.b16 %v173
        %v217 = vunpack.c.l.b16 %v174
        %v218 = vunpack.c.l.b16 %v175
        %v219 = vunpack.c.l.b16 %v176
        %v220 = vunpack.c.l.b16 %v177
        %v221 = vunpack.c.l.b16 %v178
        %v222 = vunpack.c.l.b16 %v179
        %v223 = vunpack.c.l.b16 %v180
        %v224 = vunpack.c.l.b16 %v181
        %v225 = vunpack.c.l.b16 %v182
        %v226 = vunpack.c.l.b16 %v183
        %v227 = vunpack.c.l.b16 %v184
        %v228 = vunpack.c.l.b16 %v185
        %v229 = vunpack.c.l.b16 %v186
        %v230 = vunpack.c.l.b16 %v187
        %v231 = vunpack.c.l.b16 %v188
        %v232 = vpack.c.b16 %v217, %v216
        %v233 = vpack.c.b16 %v219, %v218
        %v234 = vpack.c.b16 %v221, %v220
        %v235 = vpack.c.b16 %v223, %v222
        %v236 = vpack.c.b16 %v225, %v224
        %v237 = vpack.c.b16 %v227, %v226
        %v238 = vpack.c.b16 %v229, %v228
        %v239 = vpack.c.b16 %v231, %v230
        %v244 = vunpack.c.l.b16 %v189
        %v245 = vunpack.c.l.b16 %v190
        %v246 = vunpack.c.l.b16 %v191
        %v247 = vunpack.c.l.b16 %v192
        %v248 = vpack.c.b16 %v245, %v244
        %v249 = vpack.c.b16 %v247, %v246
        %vm252 = vcmask 261120
        %v254 = vsel %vm252, %v232, 0
        %v257 = vsel %vm252, %v233, 0
        %v260 = vsel %vm252, %v234, 0
        %v263 = vsel %vm252, %v235, 0
        %v266 = vsel %vm252, %v236, 0
        %v269 = vsel %vm252, %v237, 0
        %v272 = vsel %vm252, %v238, 0
        %v275 = vsel %vm252, %v239, 0
        %277 = vmatprep.subr.bf16.mxu0 0
        %278 = vmatpush1.bf16.msra.mxu0 %v248
        %279 = vmatprep.subr.bf16.mxu0 0
        %280 = vmatpush1.bf16.msra.mxu0 %v249
        %281 = vmatprep.subr.bf16.mxu0 0
        %282 = vmatpush1.bf16.msra.mxu0 0
        %283 = vmatprep.subr.bf16.mxu0 0
        %284 = vmatpush1.bf16.msra.mxu0 0
        %285 = vmatprep.subr.bf16.mxu0 0
        %286 = vmatpush1.bf16.msra.mxu0 0
        %287 = vmatprep.subr.bf16.mxu0 0
        %288 = vmatpush1.bf16.msra.mxu0 0
        %289 = vmatprep.subr.bf16.mxu0 0
        %290 = vmatpush1.bf16.msra.mxu0 0
        %291 = vmatprep.subr.bf16.mxu0 0
        %292 = vmatpush1.bf16.msra.mxu0 0
        %293 = vmatprep.subr.bf16.mxu0 0
        %294 = vmatpush1.bf16.msra.mxu0 0
        %295 = vmatprep.subr.bf16.mxu0 0
        %296 = vmatpush1.bf16.msra.mxu0 0
        %297 = vmatprep.subr.bf16.mxu0 0
        %298 = vmatpush1.bf16.msra.mxu0 0
        %299 = vmatprep.subr.bf16.mxu0 0
        %300 = vmatpush1.bf16.msra.mxu0 0
        %301 = vmatprep.subr.bf16.mxu0 0
        %302 = vmatpush1.bf16.msra.mxu0 0
        %303 = vmatprep.subr.bf16.mxu0 0
        %304 = vmatpush1.bf16.msra.mxu0 0
        %305 = vmatprep.subr.bf16.mxu0 0
        %306 = vmatpush1.bf16.msra.mxu0 0
        %307 = vmatprep.subr.bf16.mxu0 0
        %308 = vmatpush1.bf16.msra.mxu0 0
        %309 = vmatprep.mubr.bf16.mxu0 0
        %310 = vmatmul.mubr.bf16.gmra.mrb[0].mxu0 %v254
        %v311 = vpop.f32.mrb[0].mxu0
        %v312 = vadd.f32 %v198, %v311
        %v313 = vpop.f32.mrb[0].mxu0
        %v314 = vpop.f32.mrb[0].mxu0
        %v315 = vadd.f32 %v198, %v314
        %v316 = vpop.f32.mrb[0].mxu0
        %317 = vmatprep.mubr.bf16.mxu0 0
        %318 = vmatmul.mubr.bf16.gmra.mrb[0].mxu0 %v257
        %v319 = vpop.f32.mrb[0].mxu0
        %v320 = vadd.f32 %v198, %v319
        %v321 = vpop.f32.mrb[0].mxu0
        %v322 = vpop.f32.mrb[0].mxu0
        %v323 = vadd.f32 %v198, %v322
        %v324 = vpop.f32.mrb[0].mxu0
        %325 = vmatprep.mubr.bf16.mxu0 0
        %326 = vmatmul.mubr.bf16.gmra.mrb[0].mxu0 %v260
        %v327 = vpop.f32.mrb[0].mxu0
        %v328 = vadd.f32 %v198, %v327
        %v329 = vpop.f32.mrb[0].mxu0
        %v330 = vpop.f32.mrb[0].mxu0
        %v331 = vadd.f32 %v198, %v330
        %v332 = vpop.f32.mrb[0].mxu0
        %333 = vmatprep.mubr.bf16.mxu0 0
        %334 = vmatmul.mubr.bf16.gmra.mrb[0].mxu0 %v263
        %v335 = vpop.f32.mrb[0].mxu0
        %v336 = vadd.f32 %v198, %v335
        %v337 = vpop.f32.mrb[0].mxu0
        %v338 = vpop.f32.mrb[0].mxu0
        %v339 = vadd.f32 %v198, %v338
        %v340 = vpop.f32.mrb[0].mxu0
        %341 = vmatprep.mubr.bf16.mxu0 0
        %342 = vmatmul.mubr.bf16.gmra.mrb[0].mxu0 %v266
        %v343 = vpop.f32.mrb[0].mxu0
        %v344 = vadd.f32 %v198, %v343
        %v345 = vpop.f32.mrb[0].mxu0
        %v346 = vpop.f32.mrb[0].mxu0
        %v347 = vadd.f32 %v198, %v346
        %v348 = vpop.f32.mrb[0].mxu0
        %349 = vmatprep.mubr.bf16.mxu0 0
        %350 = vmatmul.mubr.bf16.gmra.mrb[0].mxu0 %v269
        %v351 = vpop.f32.mrb[0].mxu0
        %v352 = vadd.f32 %v198, %v351
        %v353 = vpop.f32.mrb[0].mxu0
        %v354 = vpop.f32.mrb[0].mxu0
        %v355 = vadd.f32 %v198, %v354
        %v356 = vpop.f32.mrb[0].mxu0
        %357 = vmatprep.mubr.bf16.mxu0 0
        %358 = vmatmul.mubr.bf16.gmra.mrb[0].mxu0 %v272
        %v359 = vpop.f32.mrb[0].mxu0
        %v360 = vadd.f32 %v198, %v359
        %v361 = vpop.f32.mrb[0].mxu0
        %v362 = vpop.f32.mrb[0].mxu0
        %v363 = vadd.f32 %v198, %v362
        %v364 = vpop.f32.mrb[0].mxu0
        %365 = vmatprep.mubr.bf16.mxu0 0
        %366 = vmatmul.mubr.bf16.gmra.mrb[0].mxu0 %v275
        %v367 = vpop.f32.mrb[0].mxu0
        %v368 = vadd.f32 %v198, %v367
        %v369 = vpop.f32.mrb[0].mxu0
        %v370 = vpop.f32.mrb[0].mxu0
        %v371 = vadd.f32 %v198, %v370
        %v372 = vpop.f32.mrb[0].mxu0
        %373 = vdwg.mxu0
        %v374 = vxor.u32 %v312, 2147483648
        %v375 = vxor.u32 %v315, 2147483648
        %v376 = vxor.u32 %v320, 2147483648
        %v377 = vxor.u32 %v323, 2147483648
        %v378 = vxor.u32 %v328, 2147483648
        %v379 = vxor.u32 %v331, 2147483648
        %v380 = vxor.u32 %v336, 2147483648
        %v381 = vxor.u32 %v339, 2147483648
        %v382 = vxor.u32 %v344, 2147483648
        %v383 = vxor.u32 %v347, 2147483648
        %v384 = vxor.u32 %v352, 2147483648
        %v385 = vxor.u32 %v355, 2147483648
        %v386 = vxor.u32 %v360, 2147483648
        %v387 = vxor.u32 %v363, 2147483648
        %v388 = vxor.u32 %v368, 2147483648
        %v389 = vxor.u32 %v371, 2147483648
        %v390 = vmul.f32 %v374, 1.442695
        %v391 = vpow.pop %v390
        %v392 = vmul.f32 %v375, 1.442695
        %v393 = vpow.pop %v392
        %v394 = vmul.f32 %v376, 1.442695
        %v395 = vpow.pop %v394
        %v396 = vmul.f32 %v377, 1.442695
        %v397 = vpow.pop %v396
        %v398 = vmul.f32 %v378, 1.442695
        %v399 = vpow.pop %v398
        %v400 = vmul.f32 %v379, 1.442695
        %v401 = vpow.pop %v400
        %v402 = vmul.f32 %v380, 1.442695
        %v403 = vpow.pop %v402
        %v404 = vmul.f32 %v381, 1.442695
        %v405 = vpow.pop %v404
        %v406 = vmul.f32 %v382, 1.442695
        %v407 = vpow.pop %v406
        %v408 = vmul.f32 %v383, 1.442695
        %v409 = vpow.pop %v408
        %v410 = vmul.f32 %v384, 1.442695
        %v411 = vpow.pop %v410
        %v412 = vmul.f32 %v385, 1.442695
        %v413 = vpow.pop %v412
        %v414 = vmul.f32 %v386, 1.442695
        %v415 = vpow.pop %v414
        %v416 = vmul.f32 %v387, 1.442695
        %v417 = vpow.pop %v416
        %v418 = vmul.f32 %v388, 1.442695
        %v419 = vpow.pop %v418
        %v420 = vmul.f32 %v389, 1.442695
        %v421 = vpow.pop %v420
        %v422 = vadd.f32 %v391, 1.0
        %v423 = vadd.f32 %v393, 1.0
        %v424 = vadd.f32 %v395, 1.0
        %v425 = vadd.f32 %v397, 1.0
        %v426 = vadd.f32 %v399, 1.0
        %v427 = vadd.f32 %v401, 1.0
        %v428 = vadd.f32 %v403, 1.0
        %v429 = vadd.f32 %v405, 1.0
        %v430 = vadd.f32 %v407, 1.0
        %v431 = vadd.f32 %v409, 1.0
        %v432 = vadd.f32 %v411, 1.0
        %v433 = vadd.f32 %v413, 1.0
        %v434 = vadd.f32 %v415, 1.0
        %v435 = vadd.f32 %v417, 1.0
        %v436 = vadd.f32 %v419, 1.0
        %v437 = vadd.f32 %v421, 1.0
        %v438 = vrcp.pop %v422
        %v439 = vmul.f32 1.0, %v438
        %v440 = vrcp.pop %v423
        %v441 = vmul.f32 1.0, %v440
        %v442 = vrcp.pop %v424
        %v443 = vmul.f32 1.0, %v442
        %v444 = vrcp.pop %v425
        %v445 = vmul.f32 1.0, %v444
        %v446 = vrcp.pop %v426
        %v447 = vmul.f32 1.0, %v446
        %v448 = vrcp.pop %v427
        %v449 = vmul.f32 1.0, %v448
        %v450 = vrcp.pop %v428
        %v451 = vmul.f32 1.0, %v450
        %v452 = vrcp.pop %v429
        %v453 = vmul.f32 1.0, %v452
        %v454 = vrcp.pop %v430
        %v455 = vmul.f32 1.0, %v454
        %v456 = vrcp.pop %v431
        %v457 = vmul.f32 1.0, %v456
        %v458 = vrcp.pop %v432
        %v459 = vmul.f32 1.0, %v458
        %v460 = vrcp.pop %v433
        %v461 = vmul.f32 1.0, %v460
        %v462 = vrcp.pop %v434
        %v463 = vmul.f32 1.0, %v462
        %v464 = vrcp.pop %v435
        %v465 = vmul.f32 1.0, %v464
        %v466 = vrcp.pop %v436
        %v467 = vmul.f32 1.0, %v466
        %v468 = vrcp.pop %v437
        %v469 = vmul.f32 1.0, %v468
        %470 = vst [vmem:[%s164] sm:$0xff] %v439
        %471 = vst [vmem:[%s164 + $0x8] sm:$0xff] %v441
        %472 = vst [vmem:[%s164 + $0x10] sm:$0xff] %v443
        %473 = vst [vmem:[%s164 + $0x18] sm:$0xff] %v445
        %474 = vst [vmem:[%s164 + $0x20] sm:$0xff] %v447
        %475 = vst [vmem:[%s164 + $0x28] sm:$0xff] %v449
        %476 = vst [vmem:[%s164 + $0x30] sm:$0xff] %v451
        %477 = vst [vmem:[%s164 + $0x38] sm:$0xff] %v453
        %478 = vst [vmem:[%s164 + $0x40] sm:$0xff] %v455
        %479 = vst [vmem:[%s164 + $0x48] sm:$0xff] %v457
        %480 = vst [vmem:[%s164 + $0x50] sm:$0xff] %v459
        %481 = vst [vmem:[%s164 + $0x58] sm:$0xff] %v461
        %482 = vst [vmem:[%s164 + $0x60] sm:$0xff] %v463
        %483 = vst [vmem:[%s164 + $0x68] sm:$0xff] %v465
        %484 = vst [vmem:[%s164 + $0x70] sm:$0xff] %v467
        %485 = vst [vmem:[%s164 + $0x78] sm:$0xff] %v469
        %s486 = sand.u32 %s93, 1
        %s487 = scalar_lea.sflag [#allocation3], %s486
        %s488 = sand.u32 %s93, 1
        %s489 = smul.addr %s488, 128
        %s490 = scalar_lea.vmem [#allocation2], %s489
        // Predicated region
        $region33: #{tpu_custom_call.1} parent=31 // pred_check
          %p491 = pneg %p103
        $region34: #{tpu_custom_call.1} parent=31 // pred_check_branch
          %493 = sbr.rel (%p491) target = $region36
        $region35: #{tpu_custom_call.1} parent=31 // pred_region
          %s494 = smul.u32 16, %s17
          %s496 = ssub.s32 2048, 2048
          %497 = vsyncadd %s487, %s496
          %s498 = smul.addr %s494, 128
          %s499 = scalar_lea.hbm %s3, %s498
          %s500 = sshll.u32 %s490, 4
          %s501 = int_to_ptr.vmem [resolvable:$true] %s500
          %506 = dma.vmem_to_hbm [thread:$0]  %s501, 2048, %s499, %s487, 128, 128, 8
        $region36: #{tpu_custom_call.1} parent=31 // pred_fallthru
          _
      $region32: #{tpu_custom_call.1} parent=5 // pred_fallthru
        _
      %p507 = scmp.le.s32.totalorder 2, %s12
      // Predicated region
      $region37: #{tpu_custom_call.1} parent=5 // pred_check
        %p508 = pneg %p507
      $region38: #{tpu_custom_call.1} parent=5 // pred_check_branch
        %510 = sbr.rel (%p508) target = $region40
      $region39: #{tpu_custom_call.1} parent=5 // pred_region
        %s511 = ssub.s32 %s12, 2
        // Predicated region
        $region41: #{tpu_custom_call.1} parent=39 // pred_check
          %p512 = pneg %p109
        $region42: #{tpu_custom_call.1} parent=39 // pred_check_branch
          %514 = sbr.rel (%p512) target = $region44
        $region43: #{tpu_custom_call.1} parent=39 // pred_region
          %s515 = sand.u32 %s94, 1
          %s516 = scalar_lea.sflag [#allocation3], %s515
          %s517 = sand.u32 %s94, 1
          %s518 = smul.addr %s517, 128
          %s519 = scalar_lea.vmem [#allocation2], %s518
          %520 = dma.done %s516, 2048
        $region44: #{tpu_custom_call.1} parent=39 // pred_fallthru
          _
      $region40: #{tpu_custom_call.1} parent=5 // pred_fallthru
        _
    $region6: #{tpu_custom_call.1} parent=1 // loop_footer
      %s16 = sadd.s32 1, %s12
    $region7: #{tpu_custom_call.1} parent=1 // loop_footer_branch
      %11 = sbr.rel target = $region3
    $region8: #{tpu_custom_call.1} parent=1 // loop_exit
      _
    %521 = vsyncpa [#allocation3], 1
    %s522 = scalar_lea.sflag [#allocation3], 1
    %523 = vsyncpa %s522, 1

</llo_original>
